<compile_context>
chip_gen: v5e
topology: v5e:2x2
jax: 0.10.0
libtpu: 0.0.40
codegen_flags: <defaults>
</compile_context>

<pallas_src>
import functools

import jax
import jax.numpy as jnp
from jax.experimental import pallas as pl
from jax.experimental.pallas import tpu as pltpu

LN_EPS = 1e-5


def _round_up(a: int, b: int) -> int:
    return (a + b - 1) // b * b


def _patch_merge_kernel(x_ref, w_ref, aff_ref, o_ref):
    """Fused LayerNorm(4C) + Linear(4C -> 2C, bias-free) on a tile of rows.

    x_ref:   [TM, 4C]  rows already in the torch concat order [x0|x1|x2|x3]
    w_ref:   [4C, 2C]  gamma-folded reduction weight (native dtype)
    aff_ref: [2, 2C]   row 0 = colsum(Wg) = gamma @ W^T ; row 1 = beta @ W^T (f32)
    o_ref:   [TM, 2C]

    Identity used (LN affine folded into the linear layer):
      out = rsqrt(var+eps) * (x @ Wg - mean * colsum(Wg)) + beta @ W^T
    """
    c4 = x_ref.shape[-1]
    xc = x_ref[...]

    # One full-depth MXU pass: native-dtype operands, f32 accumulation.
    acc = jnp.dot(xc, w_ref[...], preferred_element_type=jnp.float32)

    # Single-pass LayerNorm statistics over the 4C row, in f32.
    xf = xc.astype(jnp.float32)
    s = jnp.sum(xf, axis=-1, keepdims=True)
    q = jnp.sum(xf * xf, axis=-1, keepdims=True)
    mu = s * (1.0 / c4)
    var = jnp.maximum(q * (1.0 / c4) - mu * mu, 0.0)
    rinv = jax.lax.rsqrt(var + LN_EPS)

    wsum = aff_ref[0:1, :]     # [1, 2C] f32
    bias = aff_ref[1:2, :]     # [1, 2C] f32
    o_ref[...] = ((acc - mu * wsum) * rinv + bias).astype(o_ref.dtype)


@functools.partial(jax.jit, static_argnames=("tile_rows",))
def patch_merging(x, gamma, beta, w_t, *, tile_rows=2048):
    """x: [B, C, H, W] (NCHW, matching the PyTorch forward). -> [B, 2C, H/2, W/2]."""
    B, C, H, W = x.shape
    assert H % 2 == 0 and W % 2 == 0
    Hh, Wh = H // 2, W // 2
    N = B * Hh * Wh
    c2, c4 = 2 * C, 4 * C

    # --- glue: ONE relayout pass producing channel-last rows directly in the
    # torch concat order (col = (2*dx + dy)*C + c); same HBM traffic as the
    # 2x2 quadrant split already required, and the kernel then streams a
    # single lane-dense [tile, 4C] block per step.
    # TODO(synk): if the surrounding graph runs channels-last, this transpose
    # and the final NCHW transpose disappear entirely (biggest end-to-end win).
    xr = x.reshape(B, C, Hh, 2, Wh, 2)                       # [B, C, Hh, dy, Wh, dx]
    xcat = jnp.transpose(xr, (0, 2, 4, 5, 3, 1)).reshape(N, c4)   # [N, 4C]

    # --- fold the LayerNorm affine into the reduction weight (tiny, f32 fold).
    w32 = w_t.astype(jnp.float32)                            # [4C, 2C]
    wg32 = gamma.astype(jnp.float32).reshape(c4, 1) * w32
    wg = wg32.astype(w_t.dtype)                              # MXU operand, native dtype
    wsum = jnp.sum(wg32, axis=0)                             # gamma @ W^T   [2C]
    bias = beta.astype(jnp.float32) @ w32                    # beta  @ W^T   [2C]
    aff = jnp.stack([wsum, bias]).astype(jnp.float32)        # [2, 2C] epilogue consts

    # --- generation-aware VMEM budget & row tile.
    itm = jnp.dtype(x.dtype).itemsize
    w_itm = jnp.dtype(w_t.dtype).itemsize
    try:
        vmem_cap = int(pltpu.get_tpu_info().vmem_capacity_bytes)
    except Exception:
        vmem_cap = 64 * 1024 * 1024                          # conservative: v7x per-TC
    vmem_limit = (3 * vmem_cap) // 4                         # ~48 MiB v7x / ~96 MiB v5e,v6e
    headroom = 4 * 1024 * 1024                               # compiler-internal scratch
    fixed = c4 * c2 * w_itm + 2 * c2 * 4                     # 1x weight + aff (Buffered(1))
    per_row = (2 * c4 * itm                                  # double-buffered input tile
               + 2 * c2 * itm                                # double-buffered output tile
               + (2 * c4 + 2 * c2) * 4)                      # f32 cast/square + acc/out temps
    cap_rows = max(8, (vmem_limit - headroom - fixed) // per_row // 8 * 8)
    tm = int(max(8, min(tile_rows, cap_rows, _round_up(N, 8)) // 8 * 8))
    # NOTE: for production Swin dims (C >= 64) the output lane dim 2C is >= 128
    # (unmasked vst); at tiny C the kernel is still correct but lane-sparse.

    out_rows = pl.pallas_call(
        _patch_merge_kernel,
        out_shape=jax.ShapeDtypeStruct((N, c2), x.dtype),
        grid_spec=pltpu.PrefetchScalarGridSpec(
            num_scalar_prefetch=0,
            grid=(pl.cdiv(N, tm),),          # partial last block masked; no pad pass
            in_specs=[
                pl.BlockSpec((tm, c4), lambda i: (i, 0)),
                pl.BlockSpec((c4, c2), lambda i: (0, 0),
                             pipeline_mode=pl.Buffered(1)),   # constant index map
                pl.BlockSpec((2, c2), lambda i: (0, 0),
                             pipeline_mode=pl.Buffered(1)),
            ],
            out_specs=pl.BlockSpec((tm, c2), lambda i: (i, 0)),
        ),
        compiler_params=pltpu.CompilerParams(
            dimension_semantics=("parallel",),   # shard row grid across v7x's 2 TCs
            vmem_limit_bytes=int(vmem_limit),
        ),
        cost_estimate=pl.CostEstimate(
            flops=2 * N * c4 * c2,
            transcendentals=N,
            bytes_accessed=N * (c4 + c2) * itm + c4 * c2 * w_itm,
        ),
    )(xcat, wg, aff)

    out = out_rows.reshape(B, Hh, Wh, c2)
    return jnp.transpose(out, (0, 3, 1, 2))                  # [B, 2C, H/2, W/2]


def _reference(x, gamma, beta, w_t):
    """Pure-JAX reference mirroring the PyTorch forward (f32 math)."""
    B, C, H, W = x.shape
    xh = jnp.transpose(x, (0, 2, 3, 1))
    x0 = xh[:, 0::2, 0::2, :]
    x1 = xh[:, 1::2, 0::2, :]
    x2 = xh[:, 0::2, 1::2, :]
    x3 = xh[:, 1::2, 1::2, :]
    xm = jnp.concatenate([x0, x1, x2, x3], axis=-1).astype(jnp.float32)
    mean = jnp.mean(xm, axis=-1, keepdims=True)
    var = jnp.mean((xm - mean) ** 2, axis=-1, keepdims=True)
    xn = (xm - mean) * jax.lax.rsqrt(var + LN_EPS)
    y = xn * gamma.astype(jnp.float32) + beta.astype(jnp.float32)
    out = y @ w_t.astype(jnp.float32)
    return jnp.transpose(out, (0, 3, 1, 2)).astype(x.dtype)


if __name__ == "__main__":
    key = jax.random.PRNGKey(0)
    B, C, H, W = 2, 4, 16, 16       # input_resolution=(16, 16), dim=4

    k_x, k_w, k_g, k_b = jax.random.split(key, 4)
    x = jax.random.normal(k_x, (B, C, H, W), dtype=jnp.float32)

    # Parameters (shapes from __init__):
    #   norm = LayerNorm(4*dim): non-trivial gamma/beta to exercise the folding
    #   reduction = Linear(4*dim, 2*dim, bias=False): weight [2C, 4C]
    gamma = 1.0 + 0.1 * jax.random.normal(k_g, (4 * C,), dtype=jnp.float32)
    beta = 0.1 * jax.random.normal(k_b, (4 * C,), dtype=jnp.float32)
    bound = 1.0 / (4 * C) ** 0.5
    w = jax.random.uniform(k_w, (2 * C, 4 * C), minval=-bound, maxval=bound,
                           dtype=jnp.float32)
    w_t = w.T                        # [4C, 2C] so that rows @ w_t == rows @ W^T

    out = patch_merging(x, gamma, beta, w_t)
    out = jax.block_until_ready(out)

    ref = _reference(x, gamma, beta, w_t)
    assert out.shape == (B, 2 * C, H // 2, W // 2), out.shape
    err = float(jnp.max(jnp.abs(out - ref)))
    assert err < 1e-4, err

    print("KERNEL_OK")
</pallas_src>

<mosaic_0001>
module attributes {stable_mosaic.version = 11 : i64} {
  func.func @_patch_merge_kernel(%arg0: i32, %arg1: memref<128x16xf32, #tpu.memory_space<vmem>>, %arg2: memref<16x8xf32, #tpu.memory_space<vmem>>, %arg3: memref<2x8xf32, #tpu.memory_space<vmem>>, %arg4: memref<128x8xf32, #tpu.memory_space<vmem>>) attributes {dimension_semantics = [#tpu.dimension_semantics<parallel>], iteration_bounds = array<i64: 1>, scalar_prefetch = 0 : i64, scratch_operands = 0 : i64, tpu.core_type = #tpu.core_type<tc>, window_params = [{transform_indices = @transform_0, window_bounds = array<i64: 128, 16>}, {pipeline_mode = #tpu.pipeline_mode<synchronous>, transform_indices = @transform_1, window_bounds = array<i64: 16, 8>}, {pipeline_mode = #tpu.pipeline_mode<synchronous>, transform_indices = @transform_2, window_bounds = array<i64: 2, 8>}, {transform_indices = @transform_3, window_bounds = array<i64: 128, 8>}]} {
    %c0 = arith.constant 0 : index
    %c0_0 = arith.constant 0 : index
    %0 = vector.load %arg1[%c0, %c0_0] : memref<128x16xf32, #tpu.memory_space<vmem>>, vector<128x16xf32>
    %c0_1 = arith.constant 0 : index
    %c0_2 = arith.constant 0 : index
    %1 = vector.load %arg2[%c0_1, %c0_2] : memref<16x8xf32, #tpu.memory_space<vmem>>, vector<16x8xf32>
    %cst = arith.constant dense<0.000000e+00> : vector<128x8xf32>
    %2 = tpu.matmul %0, %1, %cst {dimension_numbers = #tpu.dot_dimension_numbers<[1], [0], [0], [1], [0, 0, 1, 1], [], []>} : vector<128x16xf32>, vector<16x8xf32>, vector<128x8xf32> -> vector<128x8xf32>
    %cst_3 = arith.constant dense<0.000000e+00> : vector<128xf32>
    %3 = vector.multi_reduction <add>, %0, %cst_3 [1] : vector<128x16xf32> to vector<128xf32>
    %4 = vector.shape_cast %3 : vector<128xf32> to vector<128x1xf32>
    %5 = arith.mulf %0, %0 : vector<128x16xf32>
    %cst_4 = arith.constant dense<0.000000e+00> : vector<128xf32>
    %6 = vector.multi_reduction <add>, %5, %cst_4 [1] : vector<128x16xf32> to vector<128xf32>
    %7 = vector.shape_cast %6 : vector<128xf32> to vector<128x1xf32>
    %cst_5 = arith.constant 6.250000e-02 : f32
    %8 = vector.broadcast %cst_5 : f32 to vector<128x1xf32>
    %9 = arith.mulf %4, %8 : vector<128x1xf32>
    %cst_6 = arith.constant 6.250000e-02 : f32
    %10 = vector.broadcast %cst_6 : f32 to vector<128x1xf32>
    %11 = arith.mulf %7, %10 : vector<128x1xf32>
    %12 = arith.mulf %9, %9 : vector<128x1xf32>
    %13 = arith.subf %11, %12 : vector<128x1xf32>
    %cst_7 = arith.constant 0.000000e+00 : f32
    %14 = vector.broadcast %cst_7 : f32 to vector<128x1xf32>
    %15 = arith.maximumf %13, %14 : vector<128x1xf32>
    %cst_8 = arith.constant 9.99999974E-6 : f32
    %16 = vector.broadcast %cst_8 : f32 to vector<128x1xf32>
    %17 = arith.addf %15, %16 : vector<128x1xf32>
    %18 = math.rsqrt %17 : vector<128x1xf32>
    %c0_9 = arith.constant 0 : index
    %c0_10 = arith.constant 0 : index
    %19 = vector.load %arg3[%c0_9, %c0_10] : memref<2x8xf32, #tpu.memory_space<vmem>>, vector<1x8xf32>
    %c1 = arith.constant 1 : index
    %c0_11 = arith.constant 0 : index
    %20 = vector.load %arg3[%c1, %c0_11] : memref<2x8xf32, #tpu.memory_space<vmem>>, vector<1x8xf32>
    %21 = vector.broadcast %9 : vector<128x1xf32> to vector<128x8xf32>
    %22 = vector.broadcast %19 : vector<1x8xf32> to vector<128x8xf32>
    %23 = arith.mulf %21, %22 : vector<128x8xf32>
    %24 = arith.subf %2, %23 : vector<128x8xf32>
    %25 = vector.broadcast %18 : vector<128x1xf32> to vector<128x8xf32>
    %26 = arith.mulf %24, %25 : vector<128x8xf32>
    %27 = vector.broadcast %20 : vector<1x8xf32> to vector<128x8xf32>
    %28 = arith.addf %26, %27 : vector<128x8xf32>
    %c0_12 = arith.constant 0 : index
    %c0_13 = arith.constant 0 : index
    %29 = vector.load %arg4[%c0_12, %c0_13] : memref<128x8xf32, #tpu.memory_space<vmem>>, vector<128x8xf32>
    tpu.vector_store %arg4[%c0_12, %c0_13], %28 {strides = array<i32>} : memref<128x8xf32, #tpu.memory_space<vmem>>, vector<128x8xf32>,
    return
  }
  func.func @transform_0(%arg0: i32) -> (i32, i32) {
    %c0_i32 = arith.constant 0 : i32
    %c0_i32_0 = arith.constant 0 : i32
    return %arg0, %c0_i32 : i32, i32
  }
  func.func @transform_1(%arg0: i32) -> (i32, i32) {
    %c0_i32 = arith.constant 0 : i32
    %c0_i32_0 = arith.constant 0 : i32
    %c0_i32_1 = arith.constant 0 : i32
    return %c0_i32, %c0_i32_0 : i32, i32
  }
  func.func @transform_2(%arg0: i32) -> (i32, i32) {
    %c0_i32 = arith.constant 0 : i32
    %c0_i32_0 = arith.constant 0 : i32
    %c0_i32_1 = arith.constant 0 : i32
    return %c0_i32, %c0_i32_0 : i32, i32
  }
  func.func @transform_3(%arg0: i32) -> (i32, i32) {
    %c0_i32 = arith.constant 0 : i32
    %c0_i32_0 = arith.constant 0 : i32
    return %arg0, %c0_i32 : i32, i32
  }
}

</mosaic_0001>

<llo_original>
// kernel: patch_merging.1
$region0: #{patch_merging.1}
  #allocation0 [shape = 'u32[]', space=smem, size = 0x4, offset = 0x4, fixed_abs, tag = 'smem constant byte address 0x4 - core index']
  #allocation1 [shape = 'u32[72,128]{1,0:T(1,128)}', space=vmem, size = 0x9000, scoped, tag = 'internal scratch']
  %s0 = inlined_call_operand.vmem [shape: f32[128,16], index: 0, kind: input, shape index: {}]
  %s1 = inlined_call_operand.vmem [shape: f32[16,8], index: 1, kind: input, shape index: {}]
  %s2 = inlined_call_operand.vmem [shape: f32[2,8], index: 2, kind: input, shape index: {}]
  %s3 = inlined_call_operand.vmem [shape: f32[128,8], index: 3, kind: output, shape index: {}]
  %s4 = sld [smem:[#allocation0]]
  $region22: #{patch_merging.1} parent=0
    _
  %s6 = ssub.s32 1, %s4
  %s7 = scalar_select 0, %s6, %s4
  // Predicated region
  $region2: #{patch_merging.1} parent=0 // pred_check
    _
  $region3: #{patch_merging.1} parent=0 // pred_check_branch
    %9 = sbr.rel (0) target = $region5
  $region4: #{patch_merging.1} parent=0 // pred_region
    _
  $region5: #{patch_merging.1} parent=0 // pred_fallthru
    _
  // Predicated region
  $region6: #{patch_merging.1} parent=0 // pred_check
    _
  $region7: #{patch_merging.1} parent=0 // pred_check_branch
    %11 = sbr.rel (0) target = $region9
  $region8: #{patch_merging.1} parent=0 // pred_region
    _
  $region9: #{patch_merging.1} parent=0 // pred_fallthru
    _
  // Predicated region
  $region10: #{patch_merging.1} parent=0 // pred_check
    _
  $region11: #{patch_merging.1} parent=0 // pred_check_branch
    %13 = sbr.rel (0) target = $region13
  $region12: #{patch_merging.1} parent=0 // pred_region
    _
  $region13: #{patch_merging.1} parent=0 // pred_fallthru
    _
  %v14 = vld [vmem:[%s0] sm:$0xff]
  %v15 = vld [vmem:[%s0 + $0x8] sm:$0xff]
  %v16 = vld [vmem:[%s0 + $0x10] sm:$0xff]
  %v17 = vld [vmem:[%s0 + $0x18] sm:$0xff]
  %v18 = vld [vmem:[%s0 + $0x20] sm:$0xff]
  %v19 = vld [vmem:[%s0 + $0x28] sm:$0xff]
  %v20 = vld [vmem:[%s0 + $0x30] sm:$0xff]
  %v21 = vld [vmem:[%s0 + $0x38] sm:$0xff]
  %v22 = vld [vmem:[%s0 + $0x40] sm:$0xff]
  %v23 = vld [vmem:[%s0 + $0x48] sm:$0xff]
  %v24 = vld [vmem:[%s0 + $0x50] sm:$0xff]
  %v25 = vld [vmem:[%s0 + $0x58] sm:$0xff]
  %v26 = vld [vmem:[%s0 + $0x60] sm:$0xff]
  %v27 = vld [vmem:[%s0 + $0x68] sm:$0xff]
  %v28 = vld [vmem:[%s0 + $0x70] sm:$0xff]
  %v29 = vld [vmem:[%s0 + $0x78] sm:$0xff]
  %v30 = vld [vmem:[%s1] sm:$0xff]
  %v31 = vld [vmem:[%s1 + $0x8] sm:$0xff]
  %vm32 = vcmask 130048
  %v34 = vsel %vm32, %v14, 0
  %v37 = vsel %vm32, %v15, 0
  %v40 = vsel %vm32, %v16, 0
  %v43 = vsel %vm32, %v17, 0
  %v46 = vsel %vm32, %v18, 0
  %v49 = vsel %vm32, %v19, 0
  %v52 = vsel %vm32, %v20, 0
  %v55 = vsel %vm32, %v21, 0
  %v58 = vsel %vm32, %v22, 0
  %v61 = vsel %vm32, %v23, 0
  %v64 = vsel %vm32, %v24, 0
  %v67 = vsel %vm32, %v25, 0
  %v70 = vsel %vm32, %v26, 0
  %v73 = vsel %vm32, %v27, 0
  %v76 = vsel %vm32, %v28, 0
  %v79 = vsel %vm32, %v29, 0
  %81 = vmatpush.msra.mxu0 0.0
  %82 = vmatpush.msra.mxu0 0.0
  %83 = vmatpush.msra.mxu0 0.0
  %84 = vmatpush.msra.mxu0 0.0
  %85 = vmatpush.msra.mxu0 0.0
  %86 = vmatpush.msra.mxu0 0.0
  %87 = vmatpush.msra.mxu0 0.0
  %88 = vmatpush.msra.mxu0 0.0
  %89 = vmatpush.msra.mxu0 0.0
  %90 = vmatpush.msra.mxu0 0.0
  %91 = vmatpush.msra.mxu0 0.0
  %92 = vmatpush.msra.mxu0 0.0
  %93 = vmatpush.msra.mxu0 0.0
  %94 = vmatpush.msra.mxu0 0.0
  %95 = vmatpush.msra.mxu0 %v31
  %96 = vmatpush.msra.mxu0 %v30
  %97 = vmatmul.f32.gmra.mxu0 %v34
  %v98 = vpop.f32.mrf.mxu0
  %v99 = vadd.f32 0.0, %v98
  %100 = vmatmul.f32.gmra.mxu0 %v37
  %v101 = vpop.f32.mrf.mxu0
  %v102 = vadd.f32 0.0, %v101
  %103 = vmatmul.f32.gmra.mxu0 %v40
  %v104 = vpop.f32.mrf.mxu0
  %v105 = vadd.f32 0.0, %v104
  %106 = vmatmul.f32.gmra.mxu0 %v43
  %v107 = vpop.f32.mrf.mxu0
  %v108 = vadd.f32 0.0, %v107
  %109 = vmatmul.f32.gmra.mxu0 %v46
  %v110 = vpop.f32.mrf.mxu0
  %v111 = vadd.f32 0.0, %v110
  %112 = vmatmul.f32.gmra.mxu0 %v49
  %v113 = vpop.f32.mrf.mxu0
  %v114 = vadd.f32 0.0, %v113
  %115 = vmatmul.f32.gmra.mxu0 %v52
  %v116 = vpop.f32.mrf.mxu0
  %v117 = vadd.f32 0.0, %v116
  %118 = vmatmul.f32.gmra.mxu0 %v55
  %v119 = vpop.f32.mrf.mxu0
  %v120 = vadd.f32 0.0, %v119
  %121 = vmatmul.f32.gmra.mxu0 %v58
  %v122 = vpop.f32.mrf.mxu0
  %v123 = vadd.f32 0.0, %v122
  %124 = vmatmul.f32.gmra.mxu0 %v61
  %v125 = vpop.f32.mrf.mxu0
  %v126 = vadd.f32 0.0, %v125
  %127 = vmatmul.f32.gmra.mxu0 %v64
  %v128 = vpop.f32.mrf.mxu0
  %v129 = vadd.f32 0.0, %v128
  %130 = vmatmul.f32.gmra.mxu0 %v67
  %v131 = vpop.f32.mrf.mxu0
  %v132 = vadd.f32 0.0, %v131
  %133 = vmatmul.f32.gmra.mxu0 %v70
  %v134 = vpop.f32.mrf.mxu0
  %v135 = vadd.f32 0.0, %v134
  %136 = vmatmul.f32.gmra.mxu0 %v73
  %v137 = vpop.f32.mrf.mxu0
  %v138 = vadd.f32 0.0, %v137
  %139 = vmatmul.f32.gmra.mxu0 %v76
  %v140 = vpop.f32.mrf.mxu0
  %v141 = vadd.f32 0.0, %v140
  %142 = vmatmul.f32.gmra.mxu0 %v79
  %v143 = vpop.f32.mrf.mxu0
  %v144 = vadd.f32 0.0, %v143
  %145 = vdwg.mxu0
  %v146 = vsel %vm32, %v14, 0.0
  %147 = vadd.xlane.f32.xlu0 %v146
  %v148 = vpop.xlane.xlu0 %147
  %v149 = vsel %vm32, %v15, 0.0
  %150 = vadd.xlane.f32.xlu0 %v149
  %v151 = vpop.xlane.xlu0 %150
  %v152 = vsel %vm32, %v16, 0.0
  %153 = vadd.xlane.f32.xlu0 %v152
  %v154 = vpop.xlane.xlu0 %153
  %v155 = vsel %vm32, %v17, 0.0
  %156 = vadd.xlane.f32.xlu0 %v155
  %v157 = vpop.xlane.xlu0 %156
  %v158 = vsel %vm32, %v18, 0.0
  %159 = vadd.xlane.f32.xlu0 %v158
  %v160 = vpop.xlane.xlu0 %159
  %v161 = vsel %vm32, %v19, 0.0
  %162 = vadd.xlane.f32.xlu0 %v161
  %v163 = vpop.xlane.xlu0 %162
  %v164 = vsel %vm32, %v20, 0.0
  %165 = vadd.xlane.f32.xlu0 %v164
  %v166 = vpop.xlane.xlu0 %165
  %v167 = vsel %vm32, %v21, 0.0
  %168 = vadd.xlane.f32.xlu0 %v167
  %v169 = vpop.xlane.xlu0 %168
  %v170 = vsel %vm32, %v22, 0.0
  %171 = vadd.xlane.f32.xlu0 %v170
  %v172 = vpop.xlane.xlu0 %171
  %v173 = vsel %vm32, %v23, 0.0
  %174 = vadd.xlane.f32.xlu0 %v173
  %v175 = vpop.xlane.xlu0 %174
  %v176 = vsel %vm32, %v24, 0.0
  %177 = vadd.xlane.f32.xlu0 %v176
  %v178 = vpop.xlane.xlu0 %177
  %v179 = vsel %vm32, %v25, 0.0
  %180 = vadd.xlane.f32.xlu0 %v179
  %v181 = vpop.xlane.xlu0 %180
  %v182 = vsel %vm32, %v26, 0.0
  %183 = vadd.xlane.f32.xlu0 %v182
  %v184 = vpop.xlane.xlu0 %183
  %v185 = vsel %vm32, %v27, 0.0
  %186 = vadd.xlane.f32.xlu0 %v185
  %v187 = vpop.xlane.xlu0 %186
  %v188 = vsel %vm32, %v28, 0.0
  %189 = vadd.xlane.f32.xlu0 %v188
  %v190 = vpop.xlane.xlu0 %189
  %v191 = vsel %vm32, %v29, 0.0
  %192 = vadd.xlane.f32.xlu0 %v191
  %v193 = vpop.xlane.xlu0 %192
  %v194 = vmul.f32 %v14, %v14
  %v195 = vmul.f32 %v15, %v15
  %v196 = vmul.f32 %v16, %v16
  %v197 = vmul.f32 %v17, %v17
  %v198 = vmul.f32 %v18, %v18
  %v199 = vmul.f32 %v19, %v19
  %v200 = vmul.f32 %v20, %v20
  %v201 = vmul.f32 %v21, %v21
  %v202 = vmul.f32 %v22, %v22
  %v203 = vmul.f32 %v23, %v23
  %v204 = vmul.f32 %v24, %v24
  %v205 = vmul.f32 %v25, %v25
  %v206 = vmul.f32 %v26, %v26
  %v207 = vmul.f32 %v27, %v27
  %v208 = vmul.f32 %v28, %v28
  %v209 = vmul.f32 %v29, %v29
  %v210 = vsel %vm32, %v194, 0.0
  %211 = vadd.xlane.f32.xlu0 %v210
  %v212 = vpop.xlane.xlu0 %211
  %v213 = vsel %vm32, %v195, 0.0
  %214 = vadd.xlane.f32.xlu0 %v213
  %v215 = vpop.xlane.xlu0 %214
  %v216 = vsel %vm32, %v196, 0.0
  %217 = vadd.xlane.f32.xlu0 %v216
  %v218 = vpop.xlane.xlu0 %217
  %v219 = vsel %vm32, %v197, 0.0
  %220 = vadd.xlane.f32.xlu0 %v219
  %v221 = vpop.xlane.xlu0 %220
  %v222 = vsel %vm32, %v198, 0.0
  %223 = vadd.xlane.f32.xlu0 %v222
  %v224 = vpop.xlane.xlu0 %223
  %v225 = vsel %vm32, %v199, 0.0
  %226 = vadd.xlane.f32.xlu0 %v225
  %v227 = vpop.xlane.xlu0 %226
  %v228 = vsel %vm32, %v200, 0.0
  %229 = vadd.xlane.f32.xlu0 %v228
  %v230 = vpop.xlane.xlu0 %229
  %v231 = vsel %vm32, %v201, 0.0
  %232 = vadd.xlane.f32.xlu0 %v231
  %v233 = vpop.xlane.xlu0 %232
  %v234 = vsel %vm32, %v202, 0.0
  %235 = vadd.xlane.f32.xlu0 %v234
  %v236 = vpop.xlane.xlu0 %235
  %v237 = vsel %vm32, %v203, 0.0
  %238 = vadd.xlane.f32.xlu0 %v237
  %v239 = vpop.xlane.xlu0 %238
  %v240 = vsel %vm32, %v204, 0.0
  %241 = vadd.xlane.f32.xlu0 %v240
  %v242 = vpop.xlane.xlu0 %241
  %v243 = vsel %vm32, %v205, 0.0
  %244 = vadd.xlane.f32.xlu0 %v243
  %v245 = vpop.xlane.xlu0 %244
  %v246 = vsel %vm32, %v206, 0.0
  %247 = vadd.xlane.f32.xlu0 %v246
  %v248 = vpop.xlane.xlu0 %247
  %v249 = vsel %vm32, %v207, 0.0
  %250 = vadd.xlane.f32.xlu0 %v249
  %v251 = vpop.xlane.xlu0 %250
  %v252 = vsel %vm32, %v208, 0.0
  %253 = vadd.xlane.f32.xlu0 %v252
  %v254 = vpop.xlane.xlu0 %253
  %v255 = vsel %vm32, %v209, 0.0
  %256 = vadd.xlane.f32.xlu0 %v255
  %v257 = vpop.xlane.xlu0 %256
  %v258 = vmul.f32 %v148, 0.0625
  %v259 = vmul.f32 %v151, 0.0625
  %v260 = vmul.f32 %v154, 0.0625
  %v261 = vmul.f32 %v157, 0.0625
  %v262 = vmul.f32 %v160, 0.0625
  %v263 = vmul.f32 %v163, 0.0625
  %v264 = vmul.f32 %v166, 0.0625
  %v265 = vmul.f32 %v169, 0.0625
  %v266 = vmul.f32 %v172, 0.0625
  %v267 = vmul.f32 %v175, 0.0625
  %v268 = vmul.f32 %v178, 0.0625
  %v269 = vmul.f32 %v181, 0.0625
  %v270 = vmul.f32 %v184, 0.0625
  %v271 = vmul.f32 %v187, 0.0625
  %v272 = vmul.f32 %v190, 0.0625
  %v273 = vmul.f32 %v193, 0.0625
  %v274 = vmul.f32 %v212, 0.0625
  %v275 = vmul.f32 %v215, 0.0625
  %v276 = vmul.f32 %v218, 0.0625
  %v277 = vmul.f32 %v221, 0.0625
  %v278 = vmul.f32 %v224, 0.0625
  %v279 = vmul.f32 %v227, 0.0625
  %v280 = vmul.f32 %v230, 0.0625
  %v281 = vmul.f32 %v233, 0.0625
  %v282 = vmul.f32 %v236, 0.0625
  %v283 = vmul.f32 %v239, 0.0625
  %v284 = vmul.f32 %v242, 0.0625
  %v285 = vmul.f32 %v245, 0.0625
  %v286 = vmul.f32 %v248, 0.0625
  %v287 = vmul.f32 %v251, 0.0625
  %v288 = vmul.f32 %v254, 0.0625
  %v289 = vmul.f32 %v257, 0.0625
  %v290 = vmul.f32 %v258, %v258
  %v291 = vmul.f32 %v259, %v259
  %v292 = vmul.f32 %v260, %v260
  %v293 = vmul.f32 %v261, %v261
  %v294 = vmul.f32 %v262, %v262
  %v295 = vmul.f32 %v263, %v263
  %v296 = vmul.f32 %v264, %v264
  %v297 = vmul.f32 %v265, %v265
  %v298 = vmul.f32 %v266, %v266
  %v299 = vmul.f32 %v267, %v267
  %v300 = vmul.f32 %v268, %v268
  %v301 = vmul.f32 %v269, %v269
  %v302 = vmul.f32 %v270, %v270
  %v303 = vmul.f32 %v271, %v271
  %v304 = vmul.f32 %v272, %v272
  %v305 = vmul.f32 %v273, %v273
  %v306 = vsub.f32 %v274, %v290
  %v307 = vsub.f32 %v275, %v291
  %v308 = vsub.f32 %v276, %v292
  %v309 = vsub.f32 %v277, %v293
  %v310 = vsub.f32 %v278, %v294
  %v311 = vsub.f32 %v279, %v295
  %v312 = vsub.f32 %v280, %v296
  %v313 = vsub.f32 %v281, %v297
  %v314 = vsub.f32 %v282, %v298
  %v315 = vsub.f32 %v283, %v299
  %v316 = vsub.f32 %v284, %v300
  %v317 = vsub.f32 %v285, %v301
  %v318 = vsub.f32 %v286, %v302
  %v319 = vsub.f32 %v287, %v303
  %v320 = vsub.f32 %v288, %v304
  %v321 = vsub.f32 %v289, %v305
  %v322 = vmax.f32 %v306, 0.0
  %v323 = vmax.f32 %v307, 0.0
  %v324 = vmax.f32 %v308, 0.0
  %v325 = vmax.f32 %v309, 0.0
  %v326 = vmax.f32 %v310, 0.0
  %v327 = vmax.f32 %v311, 0.0
  %v328 = vmax.f32 %v312, 0.0
  %v329 = vmax.f32 %v313, 0.0
  %v330 = vmax.f32 %v314, 0.0
  %v331 = vmax.f32 %v315, 0.0
  %v332 = vmax.f32 %v316, 0.0
  %v333 = vmax.f32 %v317, 0.0
  %v334 = vmax.f32 %v318, 0.0
  %v335 = vmax.f32 %v319, 0.0
  %v336 = vmax.f32 %v320, 0.0
  %v337 = vmax.f32 %v321, 0.0
  %v338 = vadd.f32 %v322, 1e-05
  %v339 = vadd.f32 %v323, 1e-05
  %v340 = vadd.f32 %v324, 1e-05
  %v341 = vadd.f32 %v325, 1e-05
  %v342 = vadd.f32 %v326, 1e-05
  %v343 = vadd.f32 %v327, 1e-05
  %v344 = vadd.f32 %v328, 1e-05
  %v345 = vadd.f32 %v329, 1e-05
  %v346 = vadd.f32 %v330, 1e-05
  %v347 = vadd.f32 %v331, 1e-05
  %v348 = vadd.f32 %v332, 1e-05
  %v349 = vadd.f32 %v333, 1e-05
  %v350 = vadd.f32 %v334, 1e-05
  %v351 = vadd.f32 %v335, 1e-05
  %v352 = vadd.f32 %v336, 1e-05
  %v353 = vadd.f32 %v337, 1e-05
  %v354 = vrsqrt.pop %v338
  %v355 = vmul.f32 %v354, %v338
  %v356 = vmul.f32 %v355, %v354
  %v357 = vmul.f32 0.5, %v356
  %v358 = vsub.f32 1.5, %v357
  %v359 = vmul.f32 %v354, %v358
  %vm360 = vweird.f32 %v338
  %vm361 = vweird.f32 %v354
  %vm362 = vmor %vm360, %vm361
  %v363 = vsel %vm362, %v354, %v359
  %v364 = vrsqrt.pop %v339
  %v365 = vmul.f32 %v364, %v339
  %v366 = vmul.f32 %v365, %v364
  %v367 = vmul.f32 0.5, %v366
  %v368 = vsub.f32 1.5, %v367
  %v369 = vmul.f32 %v364, %v368
  %vm370 = vweird.f32 %v339
  %vm371 = vweird.f32 %v364
  %vm372 = vmor %vm370, %vm371
  %v373 = vsel %vm372, %v364, %v369
  %v374 = vrsqrt.pop %v340
  %v375 = vmul.f32 %v374, %v340
  %v376 = vmul.f32 %v375, %v374
  %v377 = vmul.f32 0.5, %v376
  %v378 = vsub.f32 1.5, %v377
  %v379 = vmul.f32 %v374, %v378
  %vm380 = vweird.f32 %v340
  %vm381 = vweird.f32 %v374
  %vm382 = vmor %vm380, %vm381
  %v383 = vsel %vm382, %v374, %v379
  %v384 = vrsqrt.pop %v341
  %v385 = vmul.f32 %v384, %v341
  %v386 = vmul.f32 %v385, %v384
  %v387 = vmul.f32 0.5, %v386
  %v388 = vsub.f32 1.5, %v387
  %v389 = vmul.f32 %v384, %v388
  %vm390 = vweird.f32 %v341
  %vm391 = vweird.f32 %v384
  %vm392 = vmor %vm390, %vm391
  %v393 = vsel %vm392, %v384, %v389
  %v394 = vrsqrt.pop %v342
  %v395 = vmul.f32 %v394, %v342
  %v396 = vmul.f32 %v395, %v394
  %v397 = vmul.f32 0.5, %v396
  %v398 = vsub.f32 1.5, %v397
  %v399 = vmul.f32 %v394, %v398
  %vm400 = vweird.f32 %v342
  %vm401 = vweird.f32 %v394
  %vm402 = vmor %vm400, %vm401
  %v403 = vsel %vm402, %v394, %v399
  %v404 = vrsqrt.pop %v343
  %v405 = vmul.f32 %v404, %v343
  %v406 = vmul.f32 %v405, %v404
  %v407 = vmul.f32 0.5, %v406
  %v408 = vsub.f32 1.5, %v407
  %v409 = vmul.f32 %v404, %v408
  %vm410 = vweird.f32 %v343
  %vm411 = vweird.f32 %v404
  %vm412 = vmor %vm410, %vm411
  %v413 = vsel %vm412, %v404, %v409
  %v414 = vrsqrt.pop %v344
  %v415 = vmul.f32 %v414, %v344
  %v416 = vmul.f32 %v415, %v414
  %v417 = vmul.f32 0.5, %v416
  %v418 = vsub.f32 1.5, %v417
  %v419 = vmul.f32 %v414, %v418
  %vm420 = vweird.f32 %v344
  %vm421 = vweird.f32 %v414
  %vm422 = vmor %vm420, %vm421
  %v423 = vsel %vm422, %v414, %v419
  %v424 = vrsqrt.pop %v345
  %v425 = vmul.f32 %v424, %v345
  %v426 = vmul.f32 %v425, %v424
  %v427 = vmul.f32 0.5, %v426
  %v428 = vsub.f32 1.5, %v427
  %v429 = vmul.f32 %v424, %v428
  %vm430 = vweird.f32 %v345
  %vm431 = vweird.f32 %v424
  %vm432 = vmor %vm430, %vm431
  %v433 = vsel %vm432, %v424, %v429
  %v434 = vrsqrt.pop %v346
  %v435 = vmul.f32 %v434, %v346
  %v436 = vmul.f32 %v435, %v434
  %v437 = vmul.f32 0.5, %v436
  %v438 = vsub.f32 1.5, %v437
  %v439 = vmul.f32 %v434, %v438
  %vm440 = vweird.f32 %v346
  %vm441 = vweird.f32 %v434
  %vm442 = vmor %vm440, %vm441
  %v443 = vsel %vm442, %v434, %v439
  %v444 = vrsqrt.pop %v347
  %v445 = vmul.f32 %v444, %v347
  %v446 = vmul.f32 %v445, %v444
  %v447 = vmul.f32 0.5, %v446
  %v448 = vsub.f32 1.5, %v447
  %v449 = vmul.f32 %v444, %v448
  %vm450 = vweird.f32 %v347
  %vm451 = vweird.f32 %v444
  %vm452 = vmor %vm450, %vm451
  %v453 = vsel %vm452, %v444, %v449
  %v454 = vrsqrt.pop %v348
  %v455 = vmul.f32 %v454, %v348
  %v456 = vmul.f32 %v455, %v454
  %v457 = vmul.f32 0.5, %v456
  %v458 = vsub.f32 1.5, %v457
  %v459 = vmul.f32 %v454, %v458
  %vm460 = vweird.f32 %v348
  %vm461 = vweird.f32 %v454
  %vm462 = vmor %vm460, %vm461
  %v463 = vsel %vm462, %v454, %v459
  %v464 = vrsqrt.pop %v349
  %v465 = vmul.f32 %v464, %v349
  %v466 = vmul.f32 %v465, %v464
  %v467 = vmul.f32 0.5, %v466
  %v468 = vsub.f32 1.5, %v467
  %v469 = vmul.f32 %v464, %v468
  %vm470 = vweird.f32 %v349
  %vm471 = vweird.f32 %v464
  %vm472 = vmor %vm470, %vm471
  %v473 = vsel %vm472, %v464, %v469
  %v474 = vrsqrt.pop %v350
  %v475 = vmul.f32 %v474, %v350
  %v476 = vmul.f32 %v475, %v474
  %v477 = vmul.f32 0.5, %v476
  %v478 = vsub.f32 1.5, %v477
  %v479 = vmul.f32 %v474, %v478
  %vm480 = vweird.f32 %v350
  %vm481 = vweird.f32 %v474
  %vm482 = vmor %vm480, %vm481
  %v483 = vsel %vm482, %v474, %v479
  %v484 = vrsqrt.pop %v351
  %v485 = vmul.f32 %v484, %v351
  %v486 = vmul.f32 %v485, %v484
  %v487 = vmul.f32 0.5, %v486
  %v488 = vsub.f32 1.5, %v487
  %v489 = vmul.f32 %v484, %v488
  %vm490 = vweird.f32 %v351
  %vm491 = vweird.f32 %v484
  %vm492 = vmor %vm490, %vm491
  %v493 = vsel %vm492, %v484, %v489
  %v494 = vrsqrt.pop %v352
  %v495 = vmul.f32 %v494, %v352
  %v496 = vmul.f32 %v495, %v494
  %v497 = vmul.f32 0.5, %v496
  %v498 = vsub.f32 1.5, %v497
  %v499 = vmul.f32 %v494, %v498
  %vm500 = vweird.f32 %v352
  %vm501 = vweird.f32 %v494
  %vm502 = vmor %vm500, %vm501
  %v503 = vsel %vm502, %v494, %v499
  %v504 = vrsqrt.pop %v353
  %v505 = vmul.f32 %v504, %v353
  %v506 = vmul.f32 %v505, %v504
  %v507 = vmul.f32 0.5, %v506
  %v508 = vsub.f32 1.5, %v507
  %v509 = vmul.f32 %v504, %v508
  %vm510 = vweird.f32 %v353
  %vm511 = vweird.f32 %v504
  %vm512 = vmor %vm510, %vm511
  %v513 = vsel %vm512, %v504, %v509
  %v514 = vld [vmem:[%s2] sm:$0x1]
  %v515 = vld [vmem:[%s2 + $0x1] sm:$0x1]
  %v516 = vperm.slane %v514, 0
  %v517 = vmul.f32 %v258, %v516
  %v518 = vmul.f32 %v259, %v516
  %v519 = vmul.f32 %v260, %v516
  %v520 = vmul.f32 %v261, %v516
  %v521 = vmul.f32 %v262, %v516
  %v522 = vmul.f32 %v263, %v516
  %v523 = vmul.f32 %v264, %v516
  %v524 = vmul.f32 %v265, %v516
  %v525 = vmul.f32 %v266, %v516
  %v526 = vmul.f32 %v267, %v516
  %v527 = vmul.f32 %v268, %v516
  %v528 = vmul.f32 %v269, %v516
  %v529 = vmul.f32 %v270, %v516
  %v530 = vmul.f32 %v271, %v516
  %v531 = vmul.f32 %v272, %v516
  %v532 = vmul.f32 %v273, %v516
  %v533 = vsub.f32 %v99, %v517
  %v534 = vsub.f32 %v102, %v518
  %v535 = vsub.f32 %v105, %v519
  %v536 = vsub.f32 %v108, %v520
  %v537 = vsub.f32 %v111, %v521
  %v538 = vsub.f32 %v114, %v522
  %v539 = vsub.f32 %v117, %v523
  %v540 = vsub.f32 %v120, %v524
  %v541 = vsub.f32 %v123, %v525
  %v542 = vsub.f32 %v126, %v526
  %v543 = vsub.f32 %v129, %v527
  %v544 = vsub.f32 %v132, %v528
  %v545 = vsub.f32 %v135, %v529
  %v546 = vsub.f32 %v138, %v530
  %v547 = vsub.f32 %v141, %v531
  %v548 = vsub.f32 %v144, %v532
  %v549 = vmul.f32 %v533, %v363
  %v550 = vmul.f32 %v534, %v373
  %v551 = vmul.f32 %v535, %v383
  %v552 = vmul.f32 %v536, %v393
  %v553 = vmul.f32 %v537, %v403
  %v554 = vmul.f32 %v538, %v413
  %v555 = vmul.f32 %v539, %v423
  %v556 = vmul.f32 %v540, %v433
  %v557 = vmul.f32 %v541, %v443
  %v558 = vmul.f32 %v542, %v453
  %v559 = vmul.f32 %v543, %v463
  %v560 = vmul.f32 %v544, %v473
  %v561 = vmul.f32 %v545, %v483
  %v562 = vmul.f32 %v546, %v493
  %v563 = vmul.f32 %v547, %v503
  %v564 = vmul.f32 %v548, %v513
  %v565 = vperm.slane %v515, 0
  %v566 = vadd.f32 %v549, %v565
  %v567 = vadd.f32 %v550, %v565
  %v568 = vadd.f32 %v551, %v565
  %v569 = vadd.f32 %v552, %v565
  %v570 = vadd.f32 %v553, %v565
  %v571 = vadd.f32 %v554, %v565
  %v572 = vadd.f32 %v555, %v565
  %v573 = vadd.f32 %v556, %v565
  %v574 = vadd.f32 %v557, %v565
  %v575 = vadd.f32 %v558, %v565
  %v576 = vadd.f32 %v559, %v565
  %v577 = vadd.f32 %v560, %v565
  %v578 = vadd.f32 %v561, %v565
  %v579 = vadd.f32 %v562, %v565
  %v580 = vadd.f32 %v563, %v565
  %v581 = vadd.f32 %v564, %v565
  %vm582 = vcmask 64512
  %583 = vst.msk [vmem:[%s3] sm:$0xff] %vm582, %v566
  %584 = vst.msk [vmem:[%s3 + $0x8] sm:$0xff] %vm582, %v567
  %585 = vst.msk [vmem:[%s3 + $0x10] sm:$0xff] %vm582, %v568
  %586 = vst.msk [vmem:[%s3 + $0x18] sm:$0xff] %vm582, %v569
  %587 = vst.msk [vmem:[%s3 + $0x20] sm:$0xff] %vm582, %v570
  %588 = vst.msk [vmem:[%s3 + $0x28] sm:$0xff] %vm582, %v571
  %589 = vst.msk [vmem:[%s3 + $0x30] sm:$0xff] %vm582, %v572
  %590 = vst.msk [vmem:[%s3 + $0x38] sm:$0xff] %vm582, %v573
  %591 = vst.msk [vmem:[%s3 + $0x40] sm:$0xff] %vm582, %v574
  %592 = vst.msk [vmem:[%s3 + $0x48] sm:$0xff] %vm582, %v575
  %593 = vst.msk [vmem:[%s3 + $0x50] sm:$0xff] %vm582, %v576
  %594 = vst.msk [vmem:[%s3 + $0x58] sm:$0xff] %vm582, %v577
  %595 = vst.msk [vmem:[%s3 + $0x60] sm:$0xff] %vm582, %v578
  %596 = vst.msk [vmem:[%s3 + $0x68] sm:$0xff] %vm582, %v579
  %597 = vst.msk [vmem:[%s3 + $0x70] sm:$0xff] %vm582, %v580
  %598 = vst.msk [vmem:[%s3 + $0x78] sm:$0xff] %vm582, %v581
  // Predicated region
  $region14: #{patch_merging.1} parent=0 // pred_check
    _
  $region15: #{patch_merging.1} parent=0 // pred_check_branch
    %600 = sbr.rel (0) target = $region17
  $region16: #{patch_merging.1} parent=0 // pred_region
    _
  $region17: #{patch_merging.1} parent=0 // pred_fallthru
    _
  // Predicated region
  $region18: #{patch_merging.1} parent=0 // pred_check
    _
  $region19: #{patch_merging.1} parent=0 // pred_check_branch
    %602 = sbr.rel (0) target = $region21
  $region20: #{patch_merging.1} parent=0 // pred_region
    _
  $region21: #{patch_merging.1} parent=0 // pred_fallthru
    _

</llo_original>
